<compile_context>
chip_gen: v6e
topology: v6e:2x2x1
jax: 0.10.0
libtpu: 0.0.40
codegen_flags: <defaults>
</compile_context>

<pallas_src>
import jax
import jax.numpy as jnp
from jax import lax
from jax.experimental import pallas as pl
from jax.experimental.pallas import tpu as pltpu


def _projector_kernel(x_ref, w_ref, b_ref, o_ref):
    # x_ref: (tm, H) row tile; w_ref: (P, H) resident weight (nn.Linear layout)
    # b_ref: (1, P) resident bias; o_ref: (tm, P) output tile.
    acc = lax.dot_general(
        x_ref[...], w_ref[...],
        dimension_numbers=(((1,), (1,)), ((), ())),   # x @ w.T on the MXU
        preferred_element_type=jnp.float32,
    )
    acc = acc + b_ref[...].astype(jnp.float32)        # broadcast bias over rows
    o_ref[...] = acc.astype(o_ref.dtype)


def paligemma_multimodal_projector(image_features, weight, bias, *, tm=512):
    """image_features: (B, S, H); weight: (P, H) as in nn.Linear; bias: (P,)."""
    B, S, H = image_features.shape
    P = weight.shape[0]
    M = B * S

    # Row tile: multiple of 8 (sublane), never larger than the padded row count.
    tm = max(8, min(int(tm), ((M + 7) // 8) * 8))
    tm = ((tm + 7) // 8) * 8
    n_tiles = pl.cdiv(M, tm)
    M_pad = n_tiles * tm

    x2d = image_features.reshape(M, H)
    if M_pad != M:
        # Zero-pad the ragged tail tile; padded rows are sliced off afterwards.
        x2d = jnp.pad(x2d, ((0, M_pad - M), (0, 0)))
    b2d = bias.reshape(1, P)

    x_bytes = jnp.dtype(image_features.dtype).itemsize
    w_bytes = jnp.dtype(weight.dtype).itemsize
    o_bytes = x_bytes

    # Scoped-VMEM budget: double-buffered x/out tiles + resident weight/bias
    # (counted 2x to be conservative) + headroom. Clamp to a v7x-safe ceiling.
    vmem_need = (2 * tm * H * x_bytes
                 + 2 * tm * P * o_bytes
                 + 2 * P * H * w_bytes
                 + 2 * P * w_bytes
                 + (2 << 20))
    vmem_limit = int(min(max(vmem_need, 32 * 1024 * 1024), 56 * 1024 * 1024))

    cost = pl.CostEstimate(
        flops=2 * M * H * P,
        transcendentals=0,
        bytes_accessed=(M * H * x_bytes + P * H * w_bytes
                        + P * w_bytes + M * P * o_bytes),
    )

    out2d = pl.pallas_call(
        _projector_kernel,
        out_shape=jax.ShapeDtypeStruct((M_pad, P), image_features.dtype),
        grid_spec=pl.GridSpec(
            grid=(n_tiles,),
            in_specs=[
                pl.BlockSpec((tm, H), lambda i: (i, 0)),   # row tile of x
                pl.BlockSpec((P, H), lambda i: (0, 0)),    # weight, resident
                pl.BlockSpec((1, P), lambda i: (0, 0)),    # bias, resident
            ],
            out_specs=pl.BlockSpec((tm, P), lambda i: (i, 0)),
        ),
        compiler_params=pltpu.CompilerParams(
            dimension_semantics=("parallel",),
            vmem_limit_bytes=vmem_limit,
        ),
        cost_estimate=cost,
    )(x2d, weight, b2d)

    return out2d[:M].reshape(B, S, P)


if __name__ == "__main__":
    # Small, deterministic config consistent with the module's forward:
    # vision hidden_size = 32, projection_dim = 64, batch = 2, num_patches = 8.
    B, S, H, P = 2, 8, 32, 64

    key = jax.random.PRNGKey(0)
    k_x, k_w, k_b = jax.random.split(key, 3)

    image_features = jax.random.normal(k_x, (B, S, H), dtype=jnp.float32)
    # nn.Linear(H, P): weight shape (P, H), bias shape (P,)
    weight = jax.random.normal(k_w, (P, H), dtype=jnp.float32) * 0.02
    bias = jax.random.normal(k_b, (P,), dtype=jnp.float32) * 0.02

    out = paligemma_multimodal_projector(image_features, weight, bias)
    out = jax.block_until_ready(out)

    # Reference check against plain JAX (same semantics as torch nn.Linear).
    ref = image_features @ weight.T + bias
    assert out.shape == (B, S, P), out.shape
    assert jnp.allclose(out, ref, atol=1e-5, rtol=1e-5), "mismatch vs reference"

    print("KERNEL_OK")
</pallas_src>

<mosaic_0001>
module attributes {stable_mosaic.version = 11 : i64} {
  func.func @_projector_kernel(%arg0: i32, %arg1: memref<16x32xf32, #tpu.memory_space<vmem>>, %arg2: memref<64x32xf32, #tpu.memory_space<vmem>>, %arg3: memref<1x64xf32, #tpu.memory_space<vmem>>, %arg4: memref<16x64xf32, #tpu.memory_space<vmem>>) attributes {dimension_semantics = [#tpu.dimension_semantics<parallel>], iteration_bounds = array<i64: 1>, scalar_prefetch = 0 : i64, scratch_operands = 0 : i64, tpu.core_type = #tpu.core_type<tc>, window_params = [{transform_indices = @transform_0, window_bounds = array<i64: 16, 32>}, {pipeline_mode = #tpu.pipeline_mode<synchronous>, transform_indices = @transform_1, window_bounds = array<i64: 64, 32>}, {pipeline_mode = #tpu.pipeline_mode<synchronous>, transform_indices = @transform_2, window_bounds = array<i64: 1, 64>}, {transform_indices = @transform_3, window_bounds = array<i64: 16, 64>}]} {
    %c0 = arith.constant 0 : index
    %c0_0 = arith.constant 0 : index
    %0 = vector.load %arg1[%c0, %c0_0] : memref<16x32xf32, #tpu.memory_space<vmem>>, vector<16x32xf32>
    %c0_1 = arith.constant 0 : index
    %c0_2 = arith.constant 0 : index
    %1 = vector.load %arg2[%c0_1, %c0_2] : memref<64x32xf32, #tpu.memory_space<vmem>>, vector<64x32xf32>
    %cst = arith.constant dense<0.000000e+00> : vector<16x64xf32>
    %2 = tpu.matmul %0, %1, %cst {dimension_numbers = #tpu.dot_dimension_numbers<[1], [1], [0], [0], [0, 0, 1, 0], [], []>} : vector<16x32xf32>, vector<64x32xf32>, vector<16x64xf32> -> vector<16x64xf32>
    %c0_3 = arith.constant 0 : index
    %c0_4 = arith.constant 0 : index
    %3 = vector.load %arg3[%c0_3, %c0_4] : memref<1x64xf32, #tpu.memory_space<vmem>>, vector<1x64xf32>
    %4 = vector.broadcast %3 : vector<1x64xf32> to vector<16x64xf32>
    %5 = arith.addf %2, %4 : vector<16x64xf32>
    %c0_5 = arith.constant 0 : index
    %c0_6 = arith.constant 0 : index
    %6 = vector.load %arg4[%c0_5, %c0_6] : memref<16x64xf32, #tpu.memory_space<vmem>>, vector<16x64xf32>
    tpu.vector_store %arg4[%c0_5, %c0_6], %5 {strides = array<i32>} : memref<16x64xf32, #tpu.memory_space<vmem>>, vector<16x64xf32>,
    return
  }
  func.func @transform_0(%arg0: i32) -> (i32, i32) {
    %c0_i32 = arith.constant 0 : i32
    %c0_i32_0 = arith.constant 0 : i32
    return %arg0, %c0_i32 : i32, i32
  }
  func.func @transform_1(%arg0: i32) -> (i32, i32) {
    %c0_i32 = arith.constant 0 : i32
    %c0_i32_0 = arith.constant 0 : i32
    %c0_i32_1 = arith.constant 0 : i32
    return %c0_i32, %c0_i32_0 : i32, i32
  }
  func.func @transform_2(%arg0: i32) -> (i32, i32) {
    %c0_i32 = arith.constant 0 : i32
    %c0_i32_0 = arith.constant 0 : i32
    %c0_i32_1 = arith.constant 0 : i32
    return %c0_i32, %c0_i32_0 : i32, i32
  }
  func.func @transform_3(%arg0: i32) -> (i32, i32) {
    %c0_i32 = arith.constant 0 : i32
    %c0_i32_0 = arith.constant 0 : i32
    return %arg0, %c0_i32 : i32, i32
  }
}

</mosaic_0001>

<llo_original>
// kernel: tpu_custom_call.1
$region0: #{tpu_custom_call.1}
  #allocation0 [shape = 'u32[]', space=smem, size = 0x4, offset = 0x4, fixed_abs, tag = 'smem constant byte address 0x4 - core index']
  #allocation1 [shape = 'u32[144,128]{1,0:T(1,128)}', space=vmem, size = 0x12000, scoped, tag = 'internal scratch']
  %s0 = inlined_call_operand.vmem [shape: f32[16,32], index: 0, kind: input, shape index: {}]
  %s1 = inlined_call_operand.vmem [shape: f32[64,32], index: 1, kind: input, shape index: {}]
  %s2 = inlined_call_operand.vmem [shape: f32[1,64], index: 2, kind: input, shape index: {}]
  %s3 = inlined_call_operand.hbm [shape: f32[16,64], index: 3, kind: output, shape index: {}]
  %s4 = sld [smem:[#allocation0]]
  $region22: #{tpu_custom_call.1} parent=0
    _
  %s6 = ssub.s32 1, %s4
  %s7 = scalar_select 0, %s6, %s4
  $region1: #{tpu_custom_call.1} parent=0
    #allocation2 [shape = 'u8[8192]{0}', space=vmem, size = 0x2000, scoped, tag = 'output window, operand 0, single buffered']
    #allocation3 [shape = 's32[1]{0}', space=sflag, size = 0x4, scoped, tag = 'scoped memory for tpu_custom_call.1']
    %8 = vsyncpa [#allocation3], 0
    // Predicated region
    $region2: #{tpu_custom_call.1} parent=1 // pred_check
      _
    $region3: #{tpu_custom_call.1} parent=1 // pred_check_branch
      %10 = sbr.rel (0) target = $region5
    $region4: #{tpu_custom_call.1} parent=1 // pred_region
      _
    $region5: #{tpu_custom_call.1} parent=1 // pred_fallthru
      _
    // Predicated region
    $region6: #{tpu_custom_call.1} parent=1 // pred_check
      _
    $region7: #{tpu_custom_call.1} parent=1 // pred_check_branch
      %12 = sbr.rel (0) target = $region9
    $region8: #{tpu_custom_call.1} parent=1 // pred_region
      _
    $region9: #{tpu_custom_call.1} parent=1 // pred_fallthru
      _
    // Predicated region
    $region10: #{tpu_custom_call.1} parent=1 // pred_check
      _
    $region11: #{tpu_custom_call.1} parent=1 // pred_check_branch
      %14 = sbr.rel (0) target = $region13
    $region12: #{tpu_custom_call.1} parent=1 // pred_region
      _
    $region13: #{tpu_custom_call.1} parent=1 // pred_fallthru
      _
    %v15 = vld [vmem:[%s0] sm:$0xff]
    %v16 = vld [vmem:[%s0 + $0x8] sm:$0xff]
    %v17 = vld [vmem:[%s1] sm:$0xff]
    %v18 = vld [vmem:[%s1 + $0x8] sm:$0xff]
    %v19 = vld [vmem:[%s1 + $0x10] sm:$0xff]
    %v20 = vld [vmem:[%s1 + $0x18] sm:$0xff]
    %v21 = vld [vmem:[%s1 + $0x20] sm:$0xff]
    %v22 = vld [vmem:[%s1 + $0x28] sm:$0xff]
    %v23 = vld [vmem:[%s1 + $0x30] sm:$0xff]
    %v24 = vld [vmem:[%s1 + $0x38] sm:$0xff]
    %v25 = vld [vmem:[%s2] sm:$0x1]
    %v27 = vlaneseq
    %v28 = vshrl.u32 %v27, 7
    %v29 = vsub.s32 0, %v28
    %v30 = vrot.slane %v25, %v29
    %vm32 = vcmask 261120
    %v34 = vsel %vm32, %v15, 0
    %v37 = vsel %vm32, %v16, 0
    %v40 = vsel %vm32, %v17, 0
    %v43 = vsel %vm32, %v18, 0
    %v46 = vsel %vm32, %v19, 0
    %v49 = vsel %vm32, %v20, 0
    %v52 = vsel %vm32, %v21, 0
    %v55 = vsel %vm32, %v22, 0
    %v58 = vsel %vm32, %v23, 0
    %v61 = vsel %vm32, %v24, 0
    %63 = vmatprep.subr.mxu0 0.0
    %64 = vmatpush1.xpose.msra.mxu0 0.0
    %65 = vmatprep.subr.mxu0 0.0
    %66 = vmatpush1.xpose.msra.mxu0 0.0
    %67 = vmatprep.subr.mxu0 0.0
    %68 = vmatpush1.xpose.msra.mxu0 0.0
    %69 = vmatprep.subr.mxu0 0.0
    %70 = vmatpush1.xpose.msra.mxu0 0.0
    %71 = vmatprep.subr.mxu0 0.0
    %72 = vmatpush1.xpose.msra.mxu0 0.0
    %73 = vmatprep.subr.mxu0 0.0
    %74 = vmatpush1.xpose.msra.mxu0 0.0
    %75 = vmatprep.subr.mxu0 0.0
    %76 = vmatpush1.xpose.msra.mxu0 0.0
    %77 = vmatprep.subr.mxu0 0.0
    %78 = vmatpush1.xpose.msra.mxu0 0.0
    %79 = vmatprep.subr.mxu0 0.0
    %80 = vmatpush1.xpose.msra.mxu0 %v61
    %81 = vmatprep.subr.mxu0 0.0
    %82 = vmatpush1.xpose.msra.mxu0 %v58
    %83 = vmatprep.subr.mxu0 0.0
    %84 = vmatpush1.xpose.msra.mxu0 %v55
    %85 = vmatprep.subr.mxu0 0.0
    %86 = vmatpush1.xpose.msra.mxu0 %v52
    %87 = vmatprep.subr.mxu0 0.0
    %88 = vmatpush1.xpose.msra.mxu0 %v49
    %89 = vmatprep.subr.mxu0 0.0
    %90 = vmatpush1.xpose.msra.mxu0 %v46
    %91 = vmatprep.subr.mxu0 0.0
    %92 = vmatpush1.xpose.msra.mxu0 %v43
    %93 = vmatprep.subr.mxu0 0.0
    %94 = vmatpush1.xpose.msra.mxu0 %v40
    %95 = vmatprep.subr.mxu0 0.0
    %96 = vmatpush2.xpose.msra.mxu0 0.0
    %97 = vmatprep.subr.mxu0 0.0
    %98 = vmatpush2.xpose.msra.mxu0 0.0
    %99 = vmatprep.subr.mxu0 0.0
    %100 = vmatpush2.xpose.msra.mxu0 0.0
    %101 = vmatprep.subr.mxu0 0.0
    %102 = vmatpush2.xpose.msra.mxu0 0.0
    %103 = vmatprep.subr.mxu0 0.0
    %104 = vmatpush2.xpose.msra.mxu0 0.0
    %105 = vmatprep.subr.mxu0 0.0
    %106 = vmatpush2.xpose.msra.mxu0 0.0
    %107 = vmatprep.subr.mxu0 0.0
    %108 = vmatpush2.xpose.msra.mxu0 0.0
    %109 = vmatprep.subr.mxu0 0.0
    %110 = vmatpush2.xpose.msra.mxu0 0.0
    %111 = vmatprep.subr.mxu0 0.0
    %112 = vmatpush2.xpose.msra.mxu0 0.0
    %113 = vmatprep.subr.mxu0 0.0
    %114 = vmatpush2.xpose.msra.mxu0 0.0
    %115 = vmatprep.subr.mxu0 0.0
    %116 = vmatpush2.xpose.msra.mxu0 0.0
    %117 = vmatprep.subr.mxu0 0.0
    %118 = vmatpush2.xpose.msra.mxu0 0.0
    %119 = vmatprep.subr.mxu0 0.0
    %120 = vmatpush2.xpose.msra.mxu0 0.0
    %121 = vmatprep.subr.mxu0 0.0
    %122 = vmatpush2.xpose.msra.mxu0 0.0
    %123 = vmatprep.subr.mxu0 0.0
    %124 = vmatpush2.xpose.msra.mxu0 0.0
    %125 = vmatprep.subr.mxu0 0.0
    %126 = vmatpush2.xpose.msra.mxu0 0.0
    %127 = vmatprep.mubr.f32.mxu0 0.0
    %128 = vmatmul.mubr.f32.gmra.mxu0 %v34
    %v129 = vpop.f32.mrf.mxu0
    %v130 = vadd.f32 %v30, %v129
    %v131 = vpop.f32.mrf.mxu0
    %132 = vmatprep.mubr.f32.mxu0 0.0
    %133 = vmatmul.mubr.f32.gmra.mxu0 %v37
    %v134 = vpop.f32.mrf.mxu0
    %v135 = vadd.f32 %v30, %v134
    %v136 = vpop.f32.mrf.mxu0
    %137 = vdwg.mxu0
    %vm138 = vcmask 523264
    %139 = vst.msk [vmem:[#allocation2] sm:$0xff] %vm138, %v130
    %140 = vst.msk [vmem:[#allocation2 + $0x8] sm:$0xff] %vm138, %v135
    // Predicated region
    $region14: #{tpu_custom_call.1} parent=1 // pred_check
      _
    $region15: #{tpu_custom_call.1} parent=1 // pred_check_branch
      %142 = sbr.rel (0) target = $region17
    $region16: #{tpu_custom_call.1} parent=1 // pred_region
      %s144 = ssub.s32 256, 256
      %145 = vsyncadd [#allocation3], %s144
      %s146 = sshll.u32 [#allocation2], 4
      %s147 = int_to_ptr.vmem [resolvable:$true] %s146
      %152 = dma.vmem_to_hbm [thread:$0]  %s147, 256, %s3, [#allocation3], 128, 128, 8
    $region17: #{tpu_custom_call.1} parent=1 // pred_fallthru
      _
    // Predicated region
    $region18: #{tpu_custom_call.1} parent=1 // pred_check
      _
    $region19: #{tpu_custom_call.1} parent=1 // pred_check_branch
      %154 = sbr.rel (0) target = $region21
    $region20: #{tpu_custom_call.1} parent=1 // pred_region
      %155 = dma.done [#allocation3], 256
    $region21: #{tpu_custom_call.1} parent=1 // pred_fallthru
      _
    %156 = vsyncpa [#allocation3], 1

</llo_original>
